<compile_context>
chip_gen: v5e
topology: v5e:2x2
jax: 0.10.0
libtpu: 0.0.40
codegen_flags: <defaults>
</compile_context>

<pallas_src>
import numpy as np
import jax
import jax.numpy as jnp
from jax.experimental import pallas as pl
from jax.experimental.pallas import tpu as pltpu

# db4 decomposition low-pass filter == pywt.Wavelet('db4').filter_bank[0]
DB4_DEC_LO = np.array([
    -0.010597401784997278,
     0.032883011666982945,
     0.030841381835986965,
    -0.18703481171888114,
    -0.02798376941698385,
     0.6308807679295904,
     0.7148465705525415,
     0.23037781330885523,
], dtype=np.float64)
LK = 8                                            # filter length
CMF = np.array([(-1.0) ** i for i in range(LK)])  # conjugate mirror signs
PAD = (LK // 2 - 1, LK // 2)                      # (3, 4)
K_LP = DB4_DEC_LO.copy()
K_HP = DB4_DEC_LO[::-1] * CMF


# ------------------------------------------------------------------ host-side matrices
def analysis_matrix(w, Li):
    """(Li, Lo) matrix: x @ M == conv1d(pad(x,(3,4)), w, stride=2)."""
    Lo = (Li + 1) // 2
    M = np.zeros((Li, Lo), np.float64)
    for n in range(Lo):
        for k in range(LK):
            m = 2 * n + k - PAD[0]
            if 0 <= m < Li:
                M[m, n] = w[k]
    return M


def synthesis_matrix(w, Li):
    """(Lo, Li) matrix: c @ S == conv1d(pad(upsample(c)), flip(w), stride=1).

    The index relation k = 2*m + 4 - n holds for both even Li (odd-position
    upsampling, pad (3,4)) and odd Li (even-position upsampling, pad (4,3)).
    """
    g = w[::-1]                                   # fun(k, 2) = flip (KerFunT == 2)
    Lo = (Li + 1) // 2
    S = np.zeros((Lo, Li), np.float64)
    for m in range(Lo):
        for n in range(Li):
            k = 2 * m + 4 - n
            if 0 <= k < LK:
                S[m, n] = g[k]
    return S


def build_level_matrices(size, level):
    """Per-level block-diagonal fused analysis/synthesis matrices.

    Level i operates on a lane-packed slab of width W_i = 2^i * L_i (node-major
    blocks of length L_i).  Analysis: (W_i, W_{i+1}); synthesis: (W_{i+1}, W_i).
    Only the 2 distinct db4 filters appear (deduplicated, repeated on the diagonal).
    """
    layer = [size // 2 ** i + int(size % 2 ** i > 0) for i in range(level + 1)]
    bigA, bigS = [], []
    for i in range(level):
        Li = layer[i]
        AB = np.concatenate([analysis_matrix(K_LP, Li),
                             analysis_matrix(K_HP, Li)], axis=1)   # (Li, 2*Lo)
        SS = np.concatenate([synthesis_matrix(K_LP, Li),
                             synthesis_matrix(K_HP, Li)], axis=0)  # (2*Lo, Li)
        P = 2 ** i
        bigA.append(np.kron(np.eye(P), AB))                        # (W_i, W_{i+1})
        bigS.append(np.kron(np.eye(P), SS))                        # (W_{i+1}, W_i)
    return layer, bigA, bigS


def build_bias_vectors(bias_flat, level, layer):
    """Per-level lane-expanded activation biases in internal (always LP-first) order.

    The original tree swaps (LP,HP)<->(HP,LP) for odd parents; the kernel always
    produces [LP | HP], so the per-node biases are permuted here instead (the
    reconstructed signal is identical either way).
    """
    bias_flat = np.asarray(bias_flat, np.float64)
    tree = np.array([0], dtype=np.int64)          # tree index of each internal node
    betas = []
    base = 0
    for i in range(level):
        lp = 2 * tree + (tree % 2)                # tree index of LP child
        hp = 2 * tree + 1 - (tree % 2)            # tree index of HP child
        children = np.empty(2 * len(tree), dtype=np.int64)
        children[0::2] = lp
        children[1::2] = hp
        Lo = layer[i + 1]
        node_bias = bias_flat[base + children]                    # (2^(i+1),)
        betas.append(np.repeat(node_bias, Lo)[None, :])           # (1, W_{i+1})
        base += 2 ** (i + 1)
        tree = children
    return betas


# ------------------------------------------------------------------ Pallas kernel
def make_kernel(level):
    def kernel(*refs):
        x_ref = refs[0]
        A_refs = refs[1:1 + level]                # block-diag analysis matrices
        b_refs = refs[1 + level:1 + 2 * level]    # lane-expanded biases (1, W_{i+1})
        S_refs = refs[1 + 2 * level:1 + 3 * level]  # block-diag synthesis matrices
        out_ref = refs[1 + 3 * level]

        def act(v, b):
            # Thresh_SigSym: v * (sigmoid(10(v-b)) + sigmoid(-10(v+b)))
            #             == v * (1 + 0.5*(tanh(5(v-b)) - tanh(5(v+b))))
            return v * (1.0 + 0.5 * (jnp.tanh(5.0 * (v - b)) -
                                     jnp.tanh(5.0 * (v + b))))

        z = x_ref[...]                            # (TILE_B, W_0)
        # ---- LWPT (analysis): one fused matmul + activation per level ----
        for i in range(level):
            z = jnp.dot(z, A_refs[i][...], preferred_element_type=jnp.float32)
            z = act(z, b_refs[i][...])
        # ---- iLWPT (synthesis): one fused matmul per level ----
        for i in range(level - 1, -1, -1):
            z = jnp.dot(z, S_refs[i][...], preferred_element_type=jnp.float32)
        out_ref[...] = z

    return kernel


def neural_dwav_forward(x, bigA, betas, bigS, level, tile_b=8):
    B, C, L = x.shape
    assert C == 1
    tile_b = min(tile_b, B)
    assert B % tile_b == 0, "batch must be a multiple of the batch tile"
    x2d = x.reshape(B, L).astype(jnp.float32)

    in_specs = [pl.BlockSpec((tile_b, L), lambda b: (b, 0))]
    # Filter matrices & biases: constant index map -> fetched once, VMEM-resident.
    for a in bigA:
        in_specs.append(pl.BlockSpec(a.shape, lambda b: (0, 0)))
    for bt in betas:
        in_specs.append(pl.BlockSpec(bt.shape, lambda b: (0, 0)))
    for s in bigS:
        in_specs.append(pl.BlockSpec(s.shape, lambda b: (0, 0)))

    fn = pl.pallas_call(
        make_kernel(level),
        grid=(B // tile_b,),
        in_specs=in_specs,
        out_specs=pl.BlockSpec((tile_b, L), lambda b: (b, 0)),
        out_shape=jax.ShapeDtypeStruct((B, L), jnp.float32),
        compiler_params=pltpu.CompilerParams(
            dimension_semantics=("parallel",)),
    )
    out = fn(x2d, *bigA, *betas, *bigS)
    return out.reshape(B, 1, L)


# ------------------------------------------------------------------ pure-JAX reference
# Faithful conv-based re-implementation of the PyTorch tree (per-node filters,
# original LP/HP node ordering and per-node bias indexing) used as the oracle.
def build_filters(level):
    filters_by_level = []
    for i in range(level):
        fl = []
        for j in range(2 ** i):
            if j % 2 == 0:
                fl.append(K_LP)
                fl.append(K_HP)
            else:
                fl.append(K_HP)
                fl.append(K_LP)
        filters_by_level.append(fl)
    return filters_by_level


def ref_forward(x2d, filters_by_level, level, layer_sizes, bias):
    def act(v, b):
        return v * (jax.nn.sigmoid(10.0 * (v - b)) + jax.nn.sigmoid(-10.0 * (v + b)))

    def conv_a(x, w):
        Bsz, Li = x.shape
        Lo = (Li + 1) // 2
        xp = jnp.pad(x, ((0, 0), (PAD[0], PAD[1] + 1)))   # extra zero: robust slicing
        out = jnp.zeros((Bsz, Lo), x.dtype)
        for k in range(LK):
            out = out + w[k] * xp[:, k:k + 2 * Lo:2]
        return out

    def conv_s(x, w, Li):
        g = w[::-1]
        Bsz, _ = x.shape
        up = jnp.zeros((Bsz, Li), x.dtype)
        if Li % 2 == 0:
            up = up.at[:, 1::2].set(x)
            pad = PAD
        else:
            up = up.at[:, 0::2].set(x)
            pad = (LK // 2, LK // 2 - 1)
        upp = jnp.pad(up, ((0, 0), pad))
        out = jnp.zeros((Bsz, Li), x.dtype)
        for k in range(LK):
            out = out + g[k] * upp[:, k:k + Li]
        return out

    nleaf = 2 ** level
    bias_base = [2 ** (i + 1) - 2 for i in range(level)]

    emb = [None] * nleaf
    emb[0] = x2d
    for i in range(level):
        ind_hp = 0
        ind_pr = 0
        for j in range(2 ** i):
            ind_lp = ind_hp
            ind_hp = ind_lp + nleaf // 2 ** (i + 1)
            parent = emb[ind_pr]
            w_hp = filters_by_level[i][2 * j + 1].astype(np.float32)
            w_lp = filters_by_level[i][2 * j].astype(np.float32)
            emb[ind_hp] = act(conv_a(parent, w_hp), bias[bias_base[i] + 2 * j + 1])
            emb[ind_lp] = act(conv_a(parent, w_lp), bias[bias_base[i] + 2 * j])
            ind_pr += nleaf // 2 ** i
            ind_hp += nleaf // 2 ** (i + 1)
    for i in range(level - 1, -1, -1):
        ind_hp = 0
        ind_pr = 0
        Li = layer_sizes[i]
        for j in range(2 ** i):
            ind_lp = ind_hp
            ind_hp = ind_lp + nleaf // 2 ** (i + 1)
            w0 = filters_by_level[i][2 * j].astype(np.float32)
            w1 = filters_by_level[i][2 * j + 1].astype(np.float32)
            emb[ind_pr] = conv_s(emb[ind_lp], w0, Li) + conv_s(emb[ind_hp], w1, Li)
            ind_pr += nleaf // 2 ** i
            ind_hp += nleaf // 2 ** (i + 1)
    return emb[0]


# ------------------------------------------------------------------ main
if __name__ == "__main__":
    SIZE = 128         # Input_Size (lane-dense: every level slab is 128 wide)
    LEVEL = 3          # Input_Level (WPT)
    B = 16             # batch
    TILE_B = 8         # batch tile per grid step (grid = 2, parallel axis)

    layer, bigA_np, bigS_np = build_level_matrices(SIZE, LEVEL)

    key = jax.random.PRNGKey(0)
    kx, kb = jax.random.split(key)
    x = jax.random.normal(kx, (B, 1, SIZE), dtype=jnp.float32)

    # Non-zero per-node biases so the soft-threshold path is actually exercised.
    n_bias = 2 ** (LEVEL + 1) - 2
    bias_flat = 0.1 * jax.random.normal(kb, (n_bias,), dtype=jnp.float32)
    bias_np = np.asarray(bias_flat, np.float64)

    betas_np = build_bias_vectors(bias_np, LEVEL, layer)
    bigA = [jnp.asarray(a, dtype=jnp.float32) for a in bigA_np]
    bigS = [jnp.asarray(s, dtype=jnp.float32) for s in bigS_np]
    betas = [jnp.asarray(b, dtype=jnp.float32) for b in betas_np]

    out = neural_dwav_forward(x, bigA, betas, bigS, LEVEL, tile_b=TILE_B)
    out = jax.block_until_ready(out)

    filters = build_filters(LEVEL)
    ref = ref_forward(x.reshape(B, SIZE), filters, LEVEL, layer,
                      np.asarray(bias_flat, np.float32))
    ref = jax.block_until_ready(ref)

    assert out.shape == (B, 1, SIZE)
    np.testing.assert_allclose(np.asarray(out).reshape(B, SIZE),
                               np.asarray(ref), atol=1e-4, rtol=1e-4)
    print("KERNEL_OK")
</pallas_src>

<mosaic_0001>
module attributes {stable_mosaic.version = 11 : i64} {
  func.func @kernel(%arg0: i32, %arg1: memref<8x128xf32, #tpu.memory_space<vmem>>, %arg2: memref<128x128xf32, #tpu.memory_space<vmem>>, %arg3: memref<128x128xf32, #tpu.memory_space<vmem>>, %arg4: memref<128x128xf32, #tpu.memory_space<vmem>>, %arg5: memref<1x128xf32, #tpu.memory_space<vmem>>, %arg6: memref<1x128xf32, #tpu.memory_space<vmem>>, %arg7: memref<1x128xf32, #tpu.memory_space<vmem>>, %arg8: memref<128x128xf32, #tpu.memory_space<vmem>>, %arg9: memref<128x128xf32, #tpu.memory_space<vmem>>, %arg10: memref<128x128xf32, #tpu.memory_space<vmem>>, %arg11: memref<8x128xf32, #tpu.memory_space<vmem>>) attributes {dimension_semantics = [#tpu.dimension_semantics<parallel>], iteration_bounds = array<i64: 2>, scalar_prefetch = 0 : i64, scratch_operands = 0 : i64, tpu.core_type = #tpu.core_type<tc>, window_params = [{transform_indices = @transform_0, window_bounds = array<i64: 8, 128>}, {pipeline_mode = #tpu.pipeline_mode<synchronous>, transform_indices = @transform_1, window_bounds = array<i64: 128, 128>}, {pipeline_mode = #tpu.pipeline_mode<synchronous>, transform_indices = @transform_2, window_bounds = array<i64: 128, 128>}, {pipeline_mode = #tpu.pipeline_mode<synchronous>, transform_indices = @transform_3, window_bounds = array<i64: 128, 128>}, {pipeline_mode = #tpu.pipeline_mode<synchronous>, transform_indices = @transform_4, window_bounds = array<i64: 1, 128>}, {pipeline_mode = #tpu.pipeline_mode<synchronous>, transform_indices = @transform_5, window_bounds = array<i64: 1, 128>}, {pipeline_mode = #tpu.pipeline_mode<synchronous>, transform_indices = @transform_6, window_bounds = array<i64: 1, 128>}, {pipeline_mode = #tpu.pipeline_mode<synchronous>, transform_indices = @transform_7, window_bounds = array<i64: 128, 128>}, {pipeline_mode = #tpu.pipeline_mode<synchronous>, transform_indices = @transform_8, window_bounds = array<i64: 128, 128>}, {pipeline_mode = #tpu.pipeline_mode<synchronous>, transform_indices = @transform_9, window_bounds = array<i64: 128, 128>}, {transform_indices = @transform_10, window_bounds = array<i64: 8, 128>}]} {
    %c0 = arith.constant 0 : index
    %c0_0 = arith.constant 0 : index
    %0 = vector.load %arg1[%c0, %c0_0] : memref<8x128xf32, #tpu.memory_space<vmem>>, vector<8x128xf32>
    %c0_1 = arith.constant 0 : index
    %c0_2 = arith.constant 0 : index
    %1 = vector.load %arg2[%c0_1, %c0_2] : memref<128x128xf32, #tpu.memory_space<vmem>>, vector<128x128xf32>
    %cst = arith.constant dense<0.000000e+00> : vector<8x128xf32>
    %2 = tpu.matmul %0, %1, %cst {dimension_numbers = #tpu.dot_dimension_numbers<[1], [0], [0], [1], [0, 0, 1, 1], [], []>} : vector<8x128xf32>, vector<128x128xf32>, vector<8x128xf32> -> vector<8x128xf32>
    %c0_3 = arith.constant 0 : index
    %c0_4 = arith.constant 0 : index
    %3 = vector.load %arg5[%c0_3, %c0_4] : memref<1x128xf32, #tpu.memory_space<vmem>>, vector<1x128xf32>
    %4 = vector.broadcast %3 : vector<1x128xf32> to vector<8x128xf32>
    %5 = arith.subf %2, %4 : vector<8x128xf32>
    %cst_5 = arith.constant 5.000000e+00 : f32
    %6 = vector.broadcast %cst_5 : f32 to vector<8x128xf32>
    %7 = arith.mulf %6, %5 : vector<8x128xf32>
    %8 = math.tanh %7 : vector<8x128xf32>
    %9 = vector.broadcast %3 : vector<1x128xf32> to vector<8x128xf32>
    %10 = arith.addf %2, %9 : vector<8x128xf32>
    %cst_6 = arith.constant 5.000000e+00 : f32
    %11 = vector.broadcast %cst_6 : f32 to vector<8x128xf32>
    %12 = arith.mulf %11, %10 : vector<8x128xf32>
    %13 = math.tanh %12 : vector<8x128xf32>
    %14 = arith.subf %8, %13 : vector<8x128xf32>
    %cst_7 = arith.constant 5.000000e-01 : f32
    %15 = vector.broadcast %cst_7 : f32 to vector<8x128xf32>
    %16 = arith.mulf %15, %14 : vector<8x128xf32>
    %cst_8 = arith.constant 1.000000e+00 : f32
    %17 = vector.broadcast %cst_8 : f32 to vector<8x128xf32>
    %18 = arith.addf %17, %16 : vector<8x128xf32>
    %19 = arith.mulf %2, %18 : vector<8x128xf32>
    %c0_9 = arith.constant 0 : index
    %c0_10 = arith.constant 0 : index
    %20 = vector.load %arg3[%c0_9, %c0_10] : memref<128x128xf32, #tpu.memory_space<vmem>>, vector<128x128xf32>
    %cst_11 = arith.constant dense<0.000000e+00> : vector<8x128xf32>
    %21 = tpu.matmul %19, %20, %cst_11 {dimension_numbers = #tpu.dot_dimension_numbers<[1], [0], [0], [1], [0, 0, 1, 1], [], []>} : vector<8x128xf32>, vector<128x128xf32>, vector<8x128xf32> -> vector<8x128xf32>
    %c0_12 = arith.constant 0 : index
    %c0_13 = arith.constant 0 : index
    %22 = vector.load %arg6[%c0_12, %c0_13] : memref<1x128xf32, #tpu.memory_space<vmem>>, vector<1x128xf32>
    %23 = vector.broadcast %22 : vector<1x128xf32> to vector<8x128xf32>
    %24 = arith.subf %21, %23 : vector<8x128xf32>
    %cst_14 = arith.constant 5.000000e+00 : f32
    %25 = vector.broadcast %cst_14 : f32 to vector<8x128xf32>
    %26 = arith.mulf %25, %24 : vector<8x128xf32>
    %27 = math.tanh %26 : vector<8x128xf32>
    %28 = vector.broadcast %22 : vector<1x128xf32> to vector<8x128xf32>
    %29 = arith.addf %21, %28 : vector<8x128xf32>
    %cst_15 = arith.constant 5.000000e+00 : f32
    %30 = vector.broadcast %cst_15 : f32 to vector<8x128xf32>
    %31 = arith.mulf %30, %29 : vector<8x128xf32>
    %32 = math.tanh %31 : vector<8x128xf32>
    %33 = arith.subf %27, %32 : vector<8x128xf32>
    %cst_16 = arith.constant 5.000000e-01 : f32
    %34 = vector.broadcast %cst_16 : f32 to vector<8x128xf32>
    %35 = arith.mulf %34, %33 : vector<8x128xf32>
    %cst_17 = arith.constant 1.000000e+00 : f32
    %36 = vector.broadcast %cst_17 : f32 to vector<8x128xf32>
    %37 = arith.addf %36, %35 : vector<8x128xf32>
    %38 = arith.mulf %21, %37 : vector<8x128xf32>
    %c0_18 = arith.constant 0 : index
    %c0_19 = arith.constant 0 : index
    %39 = vector.load %arg4[%c0_18, %c0_19] : memref<128x128xf32, #tpu.memory_space<vmem>>, vector<128x128xf32>
    %cst_20 = arith.constant dense<0.000000e+00> : vector<8x128xf32>
    %40 = tpu.matmul %38, %39, %cst_20 {dimension_numbers = #tpu.dot_dimension_numbers<[1], [0], [0], [1], [0, 0, 1, 1], [], []>} : vector<8x128xf32>, vector<128x128xf32>, vector<8x128xf32> -> vector<8x128xf32>
    %c0_21 = arith.constant 0 : index
    %c0_22 = arith.constant 0 : index
    %41 = vector.load %arg7[%c0_21, %c0_22] : memref<1x128xf32, #tpu.memory_space<vmem>>, vector<1x128xf32>
    %42 = vector.broadcast %41 : vector<1x128xf32> to vector<8x128xf32>
    %43 = arith.subf %40, %42 : vector<8x128xf32>
    %cst_23 = arith.constant 5.000000e+00 : f32
    %44 = vector.broadcast %cst_23 : f32 to vector<8x128xf32>
    %45 = arith.mulf %44, %43 : vector<8x128xf32>
    %46 = math.tanh %45 : vector<8x128xf32>
    %47 = vector.broadcast %41 : vector<1x128xf32> to vector<8x128xf32>
    %48 = arith.addf %40, %47 : vector<8x128xf32>
    %cst_24 = arith.constant 5.000000e+00 : f32
    %49 = vector.broadcast %cst_24 : f32 to vector<8x128xf32>
    %50 = arith.mulf %49, %48 : vector<8x128xf32>
    %51 = math.tanh %50 : vector<8x128xf32>
    %52 = arith.subf %46, %51 : vector<8x128xf32>
    %cst_25 = arith.constant 5.000000e-01 : f32
    %53 = vector.broadcast %cst_25 : f32 to vector<8x128xf32>
    %54 = arith.mulf %53, %52 : vector<8x128xf32>
    %cst_26 = arith.constant 1.000000e+00 : f32
    %55 = vector.broadcast %cst_26 : f32 to vector<8x128xf32>
    %56 = arith.addf %55, %54 : vector<8x128xf32>
    %57 = arith.mulf %40, %56 : vector<8x128xf32>
    %c0_27 = arith.constant 0 : index
    %c0_28 = arith.constant 0 : index
    %58 = vector.load %arg10[%c0_27, %c0_28] : memref<128x128xf32, #tpu.memory_space<vmem>>, vector<128x128xf32>
    %cst_29 = arith.constant dense<0.000000e+00> : vector<8x128xf32>
    %59 = tpu.matmul %57, %58, %cst_29 {dimension_numbers = #tpu.dot_dimension_numbers<[1], [0], [0], [1], [0, 0, 1, 1], [], []>} : vector<8x128xf32>, vector<128x128xf32>, vector<8x128xf32> -> vector<8x128xf32>
    %c0_30 = arith.constant 0 : index
    %c0_31 = arith.constant 0 : index
    %60 = vector.load %arg9[%c0_30, %c0_31] : memref<128x128xf32, #tpu.memory_space<vmem>>, vector<128x128xf32>
    %cst_32 = arith.constant dense<0.000000e+00> : vector<8x128xf32>
    %61 = tpu.matmul %59, %60, %cst_32 {dimension_numbers = #tpu.dot_dimension_numbers<[1], [0], [0], [1], [0, 0, 1, 1], [], []>} : vector<8x128xf32>, vector<128x128xf32>, vector<8x128xf32> -> vector<8x128xf32>
    %c0_33 = arith.constant 0 : index
    %c0_34 = arith.constant 0 : index
    %62 = vector.load %arg8[%c0_33, %c0_34] : memref<128x128xf32, #tpu.memory_space<vmem>>, vector<128x128xf32>
    %cst_35 = arith.constant dense<0.000000e+00> : vector<8x128xf32>
    %63 = tpu.matmul %61, %62, %cst_35 {dimension_numbers = #tpu.dot_dimension_numbers<[1], [0], [0], [1], [0, 0, 1, 1], [], []>} : vector<8x128xf32>, vector<128x128xf32>, vector<8x128xf32> -> vector<8x128xf32>
    %c0_36 = arith.constant 0 : index
    %c0_37 = arith.constant 0 : index
    %64 = vector.load %arg11[%c0_36, %c0_37] : memref<8x128xf32, #tpu.memory_space<vmem>>, vector<8x128xf32>
    tpu.vector_store %arg11[%c0_36, %c0_37], %63 {strides = array<i32>} : memref<8x128xf32, #tpu.memory_space<vmem>>, vector<8x128xf32>,
    return
  }
  func.func @transform_0(%arg0: i32) -> (i32, i32) {
    %c0_i32 = arith.constant 0 : i32
    %c0_i32_0 = arith.constant 0 : i32
    return %arg0, %c0_i32 : i32, i32
  }
  func.func @transform_1(%arg0: i32) -> (i32, i32) {
    %c0_i32 = arith.constant 0 : i32
    %c0_i32_0 = arith.constant 0 : i32
    %c0_i32_1 = arith.constant 0 : i32
    return %c0_i32, %c0_i32_0 : i32, i32
  }
  func.func @transform_2(%arg0: i32) -> (i32, i32) {
    %c0_i32 = arith.constant 0 : i32
    %c0_i32_0 = arith.constant 0 : i32
    %c0_i32_1 = arith.constant 0 : i32
    return %c0_i32, %c0_i32_0 : i32, i32
  }
  func.func @transform_3(%arg0: i32) -> (i32, i32) {
    %c0_i32 = arith.constant 0 : i32
    %c0_i32_0 = arith.constant 0 : i32
    %c0_i32_1 = arith.constant 0 : i32
    return %c0_i32, %c0_i32_0 : i32, i32
  }
  func.func @transform_4(%arg0: i32) -> (i32, i32) {
    %c0_i32 = arith.constant 0 : i32
    %c0_i32_0 = arith.constant 0 : i32
    %c0_i32_1 = arith.constant 0 : i32
    return %c0_i32, %c0_i32_0 : i32, i32
  }
  func.func @transform_5(%arg0: i32) -> (i32, i32) {
    %c0_i32 = arith.constant 0 : i32
    %c0_i32_0 = arith.constant 0 : i32
    %c0_i32_1 = arith.constant 0 : i32
    return %c0_i32, %c0_i32_0 : i32, i32
  }
  func.func @transform_6(%arg0: i32) -> (i32, i32) {
    %c0_i32 = arith.constant 0 : i32
    %c0_i32_0 = arith.constant 0 : i32
    %c0_i32_1 = arith.constant 0 : i32
    return %c0_i32, %c0_i32_0 : i32, i32
  }
  func.func @transform_7(%arg0: i32) -> (i32, i32) {
    %c0_i32 = arith.constant 0 : i32
    %c0_i32_0 = arith.constant 0 : i32
    %c0_i32_1 = arith.constant 0 : i32
    return %c0_i32, %c0_i32_0 : i32, i32
  }
  func.func @transform_8(%arg0: i32) -> (i32, i32) {
    %c0_i32 = arith.constant 0 : i32
    %c0_i32_0 = arith.constant 0 : i32
    %c0_i32_1 = arith.constant 0 : i32
    return %c0_i32, %c0_i32_0 : i32, i32
  }
  func.func @transform_9(%arg0: i32) -> (i32, i32) {
    %c0_i32 = arith.constant 0 : i32
    %c0_i32_0 = arith.constant 0 : i32
    %c0_i32_1 = arith.constant 0 : i32
    return %c0_i32, %c0_i32_0 : i32, i32
  }
  func.func @transform_10(%arg0: i32) -> (i32, i32) {
    %c0_i32 = arith.constant 0 : i32
    %c0_i32_0 = arith.constant 0 : i32
    return %arg0, %c0_i32 : i32, i32
  }
}

</mosaic_0001>

<llo_original>
// kernel: tpu_custom_call.1
$region0: #{tpu_custom_call.1}
  #allocation0 [shape = 'u32[]', space=smem, size = 0x4, offset = 0x4, fixed_abs, tag = 'smem constant byte address 0x4 - core index']
  #allocation1 [shape = 'u32[72,128]{1,0:T(1,128)}', space=vmem, size = 0x9000, scoped, tag = 'internal scratch']
  %s0 = inlined_call_operand.hbm [shape: f32[16,128], index: 0, kind: input, shape index: {}]
  %s1 = inlined_call_operand.hbm [shape: f32[128,128], index: 1, kind: input, shape index: {}]
  %s2 = inlined_call_operand.hbm [shape: f32[128,128], index: 2, kind: input, shape index: {}]
  %s3 = inlined_call_operand.hbm [shape: f32[128,128], index: 3, kind: input, shape index: {}]
  %s4 = inlined_call_operand.vmem [shape: f32[1,128], index: 4, kind: input, shape index: {}]
  %s5 = inlined_call_operand.vmem [shape: f32[1,128], index: 5, kind: input, shape index: {}]
  %s6 = inlined_call_operand.vmem [shape: f32[1,128], index: 6, kind: input, shape index: {}]
  %s7 = inlined_call_operand.hbm [shape: f32[128,128], index: 7, kind: input, shape index: {}]
  %s8 = inlined_call_operand.hbm [shape: f32[128,128], index: 8, kind: input, shape index: {}]
  %s9 = inlined_call_operand.hbm [shape: f32[128,128], index: 9, kind: input, shape index: {}]
  %s10 = inlined_call_operand.hbm [shape: f32[16,128], index: 10, kind: output, shape index: {}]
  %s11 = sld [smem:[#allocation0]]
  $region101: #{tpu_custom_call.1} parent=0
    _
  %s13 = ssub.s32 1, %s11
  %s14 = scalar_select 0, %s13, %s11
  $region1: #{tpu_custom_call.1} parent=0
    #allocation2 [shape = 'u8[8192]{0}', space=vmem, size = 0x2000, scoped, tag = 'input window, operand 0']
    #allocation3 [shape = 's32[2]{0}', space=sflag, size = 0x8, scoped, tag = 'scoped memory for tpu_custom_call.1']
    #allocation4 [shape = 's32[2]{0}', space=sflag, size = 0x8, scoped, tag = 'scoped memory for tpu_custom_call.1']
    #allocation5 [shape = 'u8[65536]{0}', space=vmem, size = 0x10000, scoped, tag = 'input window, operand 1, single buffered']
    #allocation6 [shape = 's32[1]{0}', space=sflag, size = 0x4, scoped, tag = 'scoped memory for tpu_custom_call.1']
    #allocation7 [shape = 'u8[65536]{0}', space=vmem, size = 0x10000, scoped, tag = 'input window, operand 2, single buffered']
    #allocation8 [shape = 'u8[65536]{0}', space=vmem, size = 0x10000, scoped, tag = 'input window, operand 3, single buffered']
    #allocation9 [shape = 's32[1]{0}', space=sflag, size = 0x4, scoped, tag = 'scoped memory for tpu_custom_call.1']
    #allocation10 [shape = 'u8[65536]{0}', space=vmem, size = 0x10000, scoped, tag = 'input window, operand 7, single buffered']
    #allocation11 [shape = 'u8[65536]{0}', space=vmem, size = 0x10000, scoped, tag = 'input window, operand 8, single buffered']
    #allocation12 [shape = 's32[1]{0}', space=sflag, size = 0x4, scoped, tag = 'scoped memory for tpu_custom_call.1']
    #allocation13 [shape = 'u8[65536]{0}', space=vmem, size = 0x10000, scoped, tag = 'input window, operand 9, single buffered']
    #allocation14 [shape = 'u8[8192]{0}', space=vmem, size = 0x2000, scoped, tag = 'output window, operand 0']
    %15 = vsyncpa [#allocation3], 0
    %s16 = scalar_lea.sflag [#allocation3], 1
    %17 = vsyncpa %s16, 0
    %18 = vsyncpa [#allocation6], 0
    %19 = vsyncpa [#allocation9], 0
    %20 = vsyncpa [#allocation12], 0
    %21 = vsyncpa [#allocation4], 0
    %s22 = scalar_lea.sflag [#allocation4], 1
    %23 = vsyncpa %s22, 0
    loop: start=0, step=1, limit=4
    $region2: #{tpu_custom_call.1} parent=1 // loop_pre_header
      _
    $region3: #{tpu_custom_call.1} parent=1 // loop_header
      %s25 = sphi 0, %s29
      %p26 = scmp.ge.s32.totalorder %s25, 4
      %s35 = sphi 0, %s37
      %s38 = sphi 0, %s35
      %s39 = sphi 0, %s38
      %s55 = sphi 0, %s39
      %s59 = sphi 0, %s59
      %s61 = sphi 0, %s59
      %s62 = sphi 0, %s61
      %s76 = sphi 0, %s62
      %s80 = sphi 0, %s80
      %s82 = sphi 0, %s80
      %s83 = sphi 0, %s82
      %s97 = sphi 0, %s83
      %s101 = sphi 0, %s101
      %s103 = sphi 0, %s101
      %s104 = sphi 0, %s103
      %s118 = sphi 0, %s104
      %s122 = sphi 0, %s122
      %s124 = sphi 0, %s122
      %s125 = sphi 0, %s124
      %s139 = sphi 0, %s125
      %s143 = sphi 0, %s143
      %s145 = sphi 0, %s143
      %s146 = sphi 0, %s145
      %s160 = sphi 0, %s146
      %s164 = sphi 0, %s164
      %s166 = sphi 0, %s164
      %s167 = sphi 0, %s166
      %s181 = sphi 0, %s167
      %s185 = sphi 0, %s185
      %s187 = sphi 0, %s185
      %s188 = sphi 0, %s187
      %s202 = sphi 0, %s188
      %s206 = sphi 0, %s206
      %s208 = sphi 0, %s206
      %s209 = sphi 0, %s208
      %s223 = sphi 0, %s209
      %s227 = sphi 0, %s227
      %s229 = sphi 0, %s227
      %s230 = sphi 0, %s229
      %s244 = sphi 0, %s230
      %s250 = sphi 0, %s252
      %s253 = sphi 0, %s250
      %s254 = sphi 0, %s253
      %s270 = sphi 0, %s254
    $region4: #{tpu_custom_call.1} parent=1 // loop_header_branch
      %28 = sbr.rel (%p26) target = $region8
    $region5: #{tpu_custom_call.1} parent=1 // loop_body
      %s30 = ssub.s32 %s25, 1
      %s31 = ssub.s32 %s25, 2
      %s32 = sadd.s32 %s25, 1
      %s33 = ssub.s32 %s25, %s32
      %p34 = scmp.eq.s32.totalorder %s33, 0
      %s36 = sadd.s32 %s35, 1
      %s37 = scalar_select %p34, %s35, %s36
      %p40 = pneg %p34
      %p41 = scmp.eq.s32.totalorder %s25, 1
      %p42 = por %p40, %p41
      %p43 = scmp.ne.s32.totalorder %s35, %s38
      %p44 = scmp.eq.s32.totalorder %s25, 0
      %p45 = por %p43, %p44
      %p46 = scmp.ne.s32.totalorder %s35, %s38
      %p47 = scmp.eq.s32.totalorder %s30, 1
      %p48 = por %p46, %p47
      %p49 = scmp.ne.s32.totalorder %s38, %s39
      %p50 = scmp.eq.s32.totalorder %s30, 0
      %p51 = por %p49, %p50
      %p52 = scmp.ne.s32.totalorder %s38, %s39
      %p53 = scmp.eq.s32.totalorder %s31, 1
      %p54 = por %p52, %p53
      %p56 = scmp.ne.s32.totalorder %s39, %s55
      %p57 = scmp.eq.s32.totalorder %s31, 0
      %p58 = por %p56, %p57
      %s60 = sadd.s32 %s59, 1
      %p63 = scmp.eq.s32.totalorder %s25, 1
      %p64 = scmp.ne.s32.totalorder %s59, %s61
      %p65 = scmp.eq.s32.totalorder %s25, 0
      %p66 = por %p64, %p65
      %p67 = scmp.ne.s32.totalorder %s59, %s61
      %p68 = scmp.eq.s32.totalorder %s30, 1
      %p69 = por %p67, %p68
      %p70 = scmp.ne.s32.totalorder %s61, %s62
      %p71 = scmp.eq.s32.totalorder %s30, 0
      %p72 = por %p70, %p71
      %p73 = scmp.ne.s32.totalorder %s61, %s62
      %p74 = scmp.eq.s32.totalorder %s31, 1
      %p75 = por %p73, %p74
      %p77 = scmp.ne.s32.totalorder %s62, %s76
      %p78 = scmp.eq.s32.totalorder %s31, 0
      %p79 = por %p77, %p78
      %s81 = sadd.s32 %s80, 1
      %p84 = scmp.eq.s32.totalorder %s25, 1
      %p85 = scmp.ne.s32.totalorder %s80, %s82
      %p86 = scmp.eq.s32.totalorder %s25, 0
      %p87 = por %p85, %p86
      %p88 = scmp.ne.s32.totalorder %s80, %s82
      %p89 = scmp.eq.s32.totalorder %s30, 1
      %p90 = por %p88, %p89
      %p91 = scmp.ne.s32.totalorder %s82, %s83
      %p92 = scmp.eq.s32.totalorder %s30, 0
      %p93 = por %p91, %p92
      %p94 = scmp.ne.s32.totalorder %s82, %s83
      %p95 = scmp.eq.s32.totalorder %s31, 1
      %p96 = por %p94, %p95
      %p98 = scmp.ne.s32.totalorder %s83, %s97
      %p99 = scmp.eq.s32.totalorder %s31, 0
      %p100 = por %p98, %p99
      %s102 = sadd.s32 %s101, 1
      %p105 = scmp.eq.s32.totalorder %s25, 1
      %p106 = scmp.ne.s32.totalorder %s101, %s103
      %p107 = scmp.eq.s32.totalorder %s25, 0
      %p108 = por %p106, %p107
      %p109 = scmp.ne.s32.totalorder %s101, %s103
      %p110 = scmp.eq.s32.totalorder %s30, 1
      %p111 = por %p109, %p110
      %p112 = scmp.ne.s32.totalorder %s103, %s104
      %p113 = scmp.eq.s32.totalorder %s30, 0
      %p114 = por %p112, %p113
      %p115 = scmp.ne.s32.totalorder %s103, %s104
      %p116 = scmp.eq.s32.totalorder %s31, 1
      %p117 = por %p115, %p116
      %p119 = scmp.ne.s32.totalorder %s104, %s118
      %p120 = scmp.eq.s32.totalorder %s31, 0
      %p121 = por %p119, %p120
      %s123 = sadd.s32 %s122, 1
      %p126 = scmp.eq.s32.totalorder %s25, 1
      %p127 = scmp.ne.s32.totalorder %s122, %s124
      %p128 = scmp.eq.s32.totalorder %s25, 0
      %p129 = por %p127, %p128
      %p130 = scmp.ne.s32.totalorder %s122, %s124
      %p131 = scmp.eq.s32.totalorder %s30, 1
      %p132 = por %p130, %p131
      %p133 = scmp.ne.s32.totalorder %s124, %s125
      %p134 = scmp.eq.s32.totalorder %s30, 0
      %p135 = por %p133, %p134
      %p136 = scmp.ne.s32.totalorder %s124, %s125
      %p137 = scmp.eq.s32.totalorder %s31, 1
      %p138 = por %p136, %p137
      %p140 = scmp.ne.s32.totalorder %s125, %s139
      %p141 = scmp.eq.s32.totalorder %s31, 0
      %p142 = por %p140, %p141
      %s144 = sadd.s32 %s143, 1
      %p147 = scmp.eq.s32.totalorder %s25, 1
      %p148 = scmp.ne.s32.totalorder %s143, %s145
      %p149 = scmp.eq.s32.totalorder %s25, 0
      %p150 = por %p148, %p149
      %p151 = scmp.ne.s32.totalorder %s143, %s145
      %p152 = scmp.eq.s32.totalorder %s30, 1
      %p153 = por %p151, %p152
      %p154 = scmp.ne.s32.totalorder %s145, %s146
      %p155 = scmp.eq.s32.totalorder %s30, 0
      %p156 = por %p154, %p155
      %p157 = scmp.ne.s32.totalorder %s145, %s146
      %p158 = scmp.eq.s32.totalorder %s31, 1
      %p159 = por %p157, %p158
      %p161 = scmp.ne.s32.totalorder %s146, %s160
      %p162 = scmp.eq.s32.totalorder %s31, 0
      %p163 = por %p161, %p162
      %s165 = sadd.s32 %s164, 1
      %p168 = scmp.eq.s32.totalorder %s25, 1
      %p169 = scmp.ne.s32.totalorder %s164, %s166
      %p170 = scmp.eq.s32.totalorder %s25, 0
      %p171 = por %p169, %p170
      %p172 = scmp.ne.s32.totalorder %s164, %s166
      %p173 = scmp.eq.s32.totalorder %s30, 1
      %p174 = por %p172, %p173
      %p175 = scmp.ne.s32.totalorder %s166, %s167
      %p176 = scmp.eq.s32.totalorder %s30, 0
      %p177 = por %p175, %p176
      %p178 = scmp.ne.s32.totalorder %s166, %s167
      %p179 = scmp.eq.s32.totalorder %s31, 1
      %p180 = por %p178, %p179
      %p182 = scmp.ne.s32.totalorder %s167, %s181
      %p183 = scmp.eq.s32.totalorder %s31, 0
      %p184 = por %p182, %p183
      %s186 = sadd.s32 %s185, 1
      %p189 = scmp.eq.s32.totalorder %s25, 1
      %p190 = scmp.ne.s32.totalorder %s185, %s187
      %p191 = scmp.eq.s32.totalorder %s25, 0
      %p192 = por %p190, %p191
      %p193 = scmp.ne.s32.totalorder %s185, %s187
      %p194 = scmp.eq.s32.totalorder %s30, 1
      %p195 = por %p193, %p194
      %p196 = scmp.ne.s32.totalorder %s187, %s188
      %p197 = scmp.eq.s32.totalorder %s30, 0
      %p198 = por %p196, %p197
      %p199 = scmp.ne.s32.totalorder %s187, %s188
      %p200 = scmp.eq.s32.totalorder %s31, 1
      %p201 = por %p199, %p200
      %p203 = scmp.ne.s32.totalorder %s188, %s202
      %p204 = scmp.eq.s32.totalorder %s31, 0
      %p205 = por %p203, %p204
      %s207 = sadd.s32 %s206, 1
      %p210 = scmp.eq.s32.totalorder %s25, 1
      %p211 = scmp.ne.s32.totalorder %s206, %s208
      %p212 = scmp.eq.s32.totalorder %s25, 0
      %p213 = por %p211, %p212
      %p214 = scmp.ne.s32.totalorder %s206, %s208
      %p215 = scmp.eq.s32.totalorder %s30, 1
      %p216 = por %p214, %p215
      %p217 = scmp.ne.s32.totalorder %s208, %s209
      %p218 = scmp.eq.s32.totalorder %s30, 0
      %p219 = por %p217, %p218
      %p220 = scmp.ne.s32.totalorder %s208, %s209
      %p221 = scmp.eq.s32.totalorder %s31, 1
      %p222 = por %p220, %p221
      %p224 = scmp.ne.s32.totalorder %s209, %s223
      %p225 = scmp.eq.s32.totalorder %s31, 0
      %p226 = por %p224, %p225
      %s228 = sadd.s32 %s227, 1
      %p231 = scmp.eq.s32.totalorder %s25, 1
      %p232 = scmp.ne.s32.totalorder %s227, %s229
      %p233 = scmp.eq.s32.totalorder %s25, 0
      %p234 = por %p232, %p233
      %p235 = scmp.ne.s32.totalorder %s227, %s229
      %p236 = scmp.eq.s32.totalorder %s30, 1
      %p237 = por %p235, %p236
      %p238 = scmp.ne.s32.totalorder %s229, %s230
      %p239 = scmp.eq.s32.totalorder %s30, 0
      %p240 = por %p238, %p239
      %p241 = scmp.ne.s32.totalorder %s229, %s230
      %p242 = scmp.eq.s32.totalorder %s31, 1
      %p243 = por %p241, %p242
      %p245 = scmp.ne.s32.totalorder %s230, %s244
      %p246 = scmp.eq.s32.totalorder %s31, 0
      %p247 = por %p245, %p246
      %s248 = ssub.s32 %s25, %s32
      %p249 = scmp.eq.s32.totalorder %s248, 0
      %s251 = sadd.s32 %s250, 1
      %s252 = scalar_select %p249, %s250, %s251
      %p255 = pneg %p249
      %p256 = scmp.eq.s32.totalorder %s25, 1
      %p257 = por %p255, %p256
      %p258 = scmp.ne.s32.totalorder %s250, %s253
      %p259 = scmp.eq.s32.totalorder %s25, 0
      %p260 = por %p258, %p259
      %p261 = scmp.ne.s32.totalorder %s250, %s253
      %p262 = scmp.eq.s32.totalorder %s30, 1
      %p263 = por %p261, %p262
      %p264 = scmp.ne.s32.totalorder %s253, %s254
      %p265 = scmp.eq.s32.totalorder %s30, 0
      %p266 = por %p264, %p265
      %p267 = scmp.ne.s32.totalorder %s253, %s254
      %p268 = scmp.eq.s32.totalorder %s31, 1
      %p269 = por %p267, %p268
      %p271 = scmp.ne.s32.totalorder %s254, %s270
      %p272 = scmp.eq.s32.totalorder %s31, 0
      %p273 = por %p271, %p272
      %p274 = scmp.le.s32.totalorder 1, %s25
      %p275 = scmp.lt.s32.totalorder %s25, 3
      %p276 = pnand %p274, %p275
      %p277 = pneg %p276
      // Predicated region
      $region9: #{tpu_custom_call.1} parent=5 // pred_check
        _
      $region10: #{tpu_custom_call.1} parent=5 // pred_check_branch
        %279 = sbr.rel (%p276) target = $region12
      $region11: #{tpu_custom_call.1} parent=5 // pred_region
        %s280 = ssub.s32 %s25, 1
        // Predicated region
        $region13: #{tpu_custom_call.1} parent=11 // pred_check
          %p281 = pneg %p72
        $region14: #{tpu_custom_call.1} parent=11 // pred_check_branch
          %283 = sbr.rel (%p281) target = $region16
        $region15: #{tpu_custom_call.1} parent=11 // pred_region
          %285 = vsyncadd [#allocation6], 0
          %s286 = sshll.u32 %s1, 4
          %s287 = int_to_ptr.hbm [resolvable:$true] %s286
          %s288 = sshll.u32 [#allocation5], 4
          %s289 = int_to_ptr.vmem [resolvable:$true] %s288
          %294 = dma.hbm_to_vmem [thread:$0]  %s287, 2048, %s289, [#allocation6], 128, 128, 8
        $region16: #{tpu_custom_call.1} parent=11 // pred_fallthru
          _
        // Predicated region
        $region17: #{tpu_custom_call.1} parent=11 // pred_check
          %p295 = pneg %p93
        $region18: #{tpu_custom_call.1} parent=11 // pred_check_branch
          %297 = sbr.rel (%p295) target = $region20
        $region19: #{tpu_custom_call.1} parent=11 // pred_region
          %299 = vsyncadd [#allocation6], 0
          %s300 = sshll.u32 %s2, 4
          %s301 = int_to_ptr.hbm [resolvable:$true] %s300
          %s302 = sshll.u32 [#allocation7], 4
          %s303 = int_to_ptr.vmem [resolvable:$true] %s302
          %308 = dma.hbm_to_vmem [thread:$0]  %s301, 2048, %s303, [#allocation6], 128, 128, 8
        $region20: #{tpu_custom_call.1} parent=11 // pred_fallthru
          _
        // Predicated region
        $region21: #{tpu_custom_call.1} parent=11 // pred_check
          %p309 = pneg %p114
        $region22: #{tpu_custom_call.1} parent=11 // pred_check_branch
          %311 = sbr.rel (%p309) target = $region24
        $region23: #{tpu_custom_call.1} parent=11 // pred_region
          %313 = vsyncadd [#allocation9], 0
          %s314 = sshll.u32 %s3, 4
          %s315 = int_to_ptr.hbm [resolvable:$true] %s314
          %s316 = sshll.u32 [#allocation8], 4
          %s317 = int_to_ptr.vmem [resolvable:$true] %s316
          %322 = dma.hbm_to_vmem [thread:$0]  %s315, 2048, %s317, [#allocation9], 128, 128, 8
        $region24: #{tpu_custom_call.1} parent=11 // pred_fallthru
          _
        // Predicated region
        $region25: #{tpu_custom_call.1} parent=11 // pred_check
          %p323 = pneg %p135
        $region26: #{tpu_custom_call.1} parent=11 // pred_check_branch
          %325 = sbr.rel (%p323) target = $region28
        $region27: #{tpu_custom_call.1} parent=11 // pred_region
          _
        $region28: #{tpu_custom_call.1} parent=11 // pred_fallthru
          _
        // Predicated region
        $region29: #{tpu_custom_call.1} parent=11 // pred_check
          %p326 = pneg %p156
        $region30: #{tpu_custom_call.1} parent=11 // pred_check_branch
          %328 = sbr.rel (%p326) target = $region32
        $region31: #{tpu_custom_call.1} parent=11 // pred_region
          _
        $region32: #{tpu_custom_call.1} parent=11 // pred_fallthru
          _
        // Predicated region
        $region33: #{tpu_custom_call.1} parent=11 // pred_check
          %p329 = pneg %p177
        $region34: #{tpu_custom_call.1} parent=11 // pred_check_branch
          %331 = sbr.rel (%p329) target = $region36
        $region35: #{tpu_custom_call.1} parent=11 // pred_region
          _
        $region36: #{tpu_custom_call.1} parent=11 // pred_fallthru
          _
        // Predicated region
        $region37: #{tpu_custom_call.1} parent=11 // pred_check
          %p332 = pneg %p198
        $region38: #{tpu_custom_call.1} parent=11 // pred_check_branch
          %334 = sbr.rel (%p332) target = $region40
        $region39: #{tpu_custom_call.1} parent=11 // pred_region
          %336 = vsyncadd [#allocation9], 0
          %s337 = sshll.u32 %s7, 4
          %s338 = int_to_ptr.hbm [resolvable:$true] %s337
          %s339 = sshll.u32 [#allocation10], 4
          %s340 = int_to_ptr.vmem [resolvable:$true] %s339
          %345 = dma.hbm_to_vmem [thread:$0]  %s338, 2048, %s340, [#allocation9], 128, 128, 8
        $region40: #{tpu_custom_call.1} parent=11 // pred_fallthru
          _
        // Predicated region
        $region41: #{tpu_custom_call.1} parent=11 // pred_check
          %p346 = pneg %p219
        $region42: #{tpu_custom_call.1} parent=11 // pred_check_branch
          %348 = sbr.rel (%p346) target = $region44
        $region43: #{tpu_custom_call.1} parent=11 // pred_region
          %350 = vsyncadd [#allocation12], 0
          %s351 = sshll.u32 %s8, 4
          %s352 = int_to_ptr.hbm [resolvable:$true] %s351
          %s353 = sshll.u32 [#allocation11], 4
          %s354 = int_to_ptr.vmem [resolvable:$true] %s353
          %359 = dma.hbm_to_vmem [thread:$0]  %s352, 2048, %s354, [#allocation12], 128, 128, 8
        $region44: #{tpu_custom_call.1} parent=11 // pred_fallthru
          _
        // Predicated region
        $region45: #{tpu_custom_call.1} parent=11 // pred_check
          %p360 = pneg %p240
        $region46: #{tpu_custom_call.1} parent=11 // pred_check_branch
          %362 = sbr.rel (%p360) target = $region48
        $region47: #{tpu_custom_call.1} parent=11 // pred_region
          %364 = vsyncadd [#allocation12], 0
          %s365 = sshll.u32 %s9, 4
          %s366 = int_to_ptr.hbm [resolvable:$true] %s365
          %s367 = sshll.u32 [#allocation13], 4
          %s368 = int_to_ptr.vmem [resolvable:$true] %s367
          %373 = dma.hbm_to_vmem [thread:$0]  %s366, 2048, %s368, [#allocation12], 128, 128, 8
        $region48: #{tpu_custom_call.1} parent=11 // pred_fallthru
          _
      $region12: #{tpu_custom_call.1} parent=5 // pred_fallthru
        _
      %p374 = scmp.lt.s32.totalorder %s25, 2
      // Predicated region
      $region49: #{tpu_custom_call.1} parent=5 // pred_check
        %p375 = pneg %p374
      $region50: #{tpu_custom_call.1} parent=5 // pred_check_branch
        %377 = sbr.rel (%p375) target = $region52
      $region51: #{tpu_custom_call.1} parent=5 // pred_region
        // Predicated region
        $region53: #{tpu_custom_call.1} parent=51 // pred_check
          %p378 = pneg %p45
        $region54: #{tpu_custom_call.1} parent=51 // pred_check_branch
          %380 = sbr.rel (%p378) target = $region56
        $region55: #{tpu_custom_call.1} parent=51 // pred_region
          %s381 = sand.u32 %s35, 1
          %s382 = scalar_lea.sflag [#allocation3], %s381
          %s383 = sand.u32 %s35, 1
          %s384 = smul.addr %s383, 8
          %s385 = scalar_lea.vmem [#allocation2], %s384
          %387 = vsyncadd %s382, 0
          %s388 = smul.addr %s25, 8
          %s389 = scalar_lea.hbm %s0, %s388
          %s391 = sshll.u32 %s389, 4
          %s392 = int_to_ptr.hbm [resolvable:$true] %s391
          %s393 = sshll.u32 %s385, 4
          %s394 = int_to_ptr.vmem [resolvable:$true] %s393
          %396 = dma.hbm_to_vmem [thread:$0]  %s392, 128, %s394, %s382
        $region56: #{tpu_custom_call.1} parent=51 // pred_fallthru
          _
      $region52: #{tpu_custom_call.1} parent=5 // pred_fallthru
        _
      %p397 = scmp.le.s32.totalorder 1, %s25
      %p398 = scmp.lt.s32.totalorder %s25, 3
      %p399 = pnand %p397, %p398
      %p400 = pneg %p399
      // Predicated region
      $region57: #{tpu_custom_call.1} parent=5 // pred_check
        _
      $region58: #{tpu_custom_call.1} parent=5 // pred_check_branch
        %402 = sbr.rel (%p399) target = $region60
      $region59: #{tpu_custom_call.1} parent=5 // pred_region
        %s403 = ssub.s32 %s25, 1
        %s404 = sand.u32 %s38, 1
        %s405 = scalar_lea.sflag [#allocation3], %s404
        %s406 = sand.u32 %s38, 1
        %s407 = smul.addr %s406, 8
        %s408 = scalar_lea.vmem [#allocation2], %s407
        // Predicated region
        $region61: #{tpu_custom_call.1} parent=59 // pred_check
          %p409 = pneg %p51
        $region62: #{tpu_custom_call.1} parent=59 // pred_check_branch
          %411 = sbr.rel (%p409) target = $region64
        $region63: #{tpu_custom_call.1} parent=59 // pred_region
          %413 = dma.done %s405, 128
        $region64: #{tpu_custom_call.1} parent=59 // pred_fallthru
          _
        // Predicated region
        $region65: #{tpu_custom_call.1} parent=59 // pred_check
          %p414 = pneg %p72
        $region66: #{tpu_custom_call.1} parent=59 // pred_check_branch
          %416 = sbr.rel (%p414) target = $region68
        $region67: #{tpu_custom_call.1} parent=59 // pred_region
          %418 = dma.done [#allocation6], 2048
        $region68: #{tpu_custom_call.1} parent=59 // pred_fallthru
          _
        // Predicated region
        $region69: #{tpu_custom_call.1} parent=59 // pred_check
          %p419 = pneg %p93
        $region70: #{tpu_custom_call.1} parent=59 // pred_check_branch
          %421 = sbr.rel (%p419) target = $region72
        $region71: #{tpu_custom_call.1} parent=59 // pred_region
          %423 = dma.done [#allocation6], 2048
        $region72: #{tpu_custom_call.1} parent=59 // pred_fallthru
          _
        // Predicated region
        $region73: #{tpu_custom_call.1} parent=59 // pred_check
          %p424 = pneg %p114
        $region74: #{tpu_custom_call.1} parent=59 // pred_check_branch
          %426 = sbr.rel (%p424) target = $region76
        $region75: #{tpu_custom_call.1} parent=59 // pred_region
          %428 = dma.done [#allocation9], 2048
        $region76: #{tpu_custom_call.1} parent=59 // pred_fallthru
          _
        // Predicated region
        $region77: #{tpu_custom_call.1} parent=59 // pred_check
          %p429 = pneg %p198
        $region78: #{tpu_custom_call.1} parent=59 // pred_check_branch
          %431 = sbr.rel (%p429) target = $region80
        $region79: #{tpu_custom_call.1} parent=59 // pred_region
          %433 = dma.done [#allocation9], 2048
        $region80: #{tpu_custom_call.1} parent=59 // pred_fallthru
          _
        // Predicated region
        $region81: #{tpu_custom_call.1} parent=59 // pred_check
          %p434 = pneg %p219
        $region82: #{tpu_custom_call.1} parent=59 // pred_check_branch
          %436 = sbr.rel (%p434) target = $region84
        $region83: #{tpu_custom_call.1} parent=59 // pred_region
          %438 = dma.done [#allocation12], 2048
        $region84: #{tpu_custom_call.1} parent=59 // pred_fallthru
          _
        // Predicated region
        $region85: #{tpu_custom_call.1} parent=59 // pred_check
          %p439 = pneg %p240
        $region86: #{tpu_custom_call.1} parent=59 // pred_check_branch
          %441 = sbr.rel (%p439) target = $region88
        $region87: #{tpu_custom_call.1} parent=59 // pred_region
          %443 = dma.done [#allocation12], 2048
        $region88: #{tpu_custom_call.1} parent=59 // pred_fallthru
          _
        %s444 = sand.u32 %s38, 1
        %s445 = scalar_lea.sflag [#allocation3], %s444
        %s446 = sand.u32 %s38, 1
        %s447 = smul.addr %s446, 8
        %s448 = scalar_lea.vmem [#allocation2], %s447
        %p449 = pneg %p51
        %p450 = pneg %p48
        %p451 = pneg %p72
        %p452 = pneg %p69
        %p453 = pneg %p93
        %p454 = pneg %p90
        %p455 = pneg %p114
        %p456 = pneg %p111
        %p457 = pneg %p135
        %p458 = pneg %p132
        %p459 = pneg %p156
        %p460 = pneg %p153
        %p461 = pneg %p177
        %p462 = pneg %p174
        %p463 = pneg %p198
        %p464 = pneg %p195
        %p465 = pneg %p219
        %p466 = pneg %p216
        %p467 = pneg %p240
        %p468 = pneg %p237
        %p469 = pneg %p266
        %p470 = pneg %p263
        %s471 = sand.u32 %s253, 1
        %s472 = scalar_lea.sflag [#allocation4], %s471
        %s473 = sand.u32 %s253, 1
        %s474 = smul.addr %s473, 8
        %s475 = scalar_lea.vmem [#allocation14], %s474
        %v476 = vld [vmem:[%s408] sm:$0xff]
        %v477 = vld [vmem:[#allocation5] sm:$0xff]
        %v478 = vld [vmem:[#allocation5 + $0x8] sm:$0xff]
        %v479 = vld [vmem:[#allocation5 + $0x10] sm:$0xff]
        %v480 = vld [vmem:[#allocation5 + $0x18] sm:$0xff]
        %v481 = vld [vmem:[#allocation5 + $0x20] sm:$0xff]
        %v482 = vld [vmem:[#allocation5 + $0x28] sm:$0xff]
        %v483 = vld [vmem:[#allocation5 + $0x30] sm:$0xff]
        %v484 = vld [vmem:[#allocation5 + $0x38] sm:$0xff]
        %v485 = vld [vmem:[#allocation5 + $0x40] sm:$0xff]
        %v486 = vld [vmem:[#allocation5 + $0x48] sm:$0xff]
        %v487 = vld [vmem:[#allocation5 + $0x50] sm:$0xff]
        %v488 = vld [vmem:[#allocation5 + $0x58] sm:$0xff]
        %v489 = vld [vmem:[#allocation5 + $0x60] sm:$0xff]
        %v490 = vld [vmem:[#allocation5 + $0x68] sm:$0xff]
        %v491 = vld [vmem:[#allocation5 + $0x70] sm:$0xff]
        %v492 = vld [vmem:[#allocation5 + $0x78] sm:$0xff]
        %493 = vmatpush.msra.mxu0 %v492
        %494 = vmatpush.msra.mxu0 %v491
        %495 = vmatpush.msra.mxu0 %v490
        %496 = vmatpush.msra.mxu0 %v489
        %497 = vmatpush.msra.mxu0 %v488
        %498 = vmatpush.msra.mxu0 %v487
        %499 = vmatpush.msra.mxu0 %v486
        %500 = vmatpush.msra.mxu0 %v485
        %501 = vmatpush.msra.mxu0 %v484
        %502 = vmatpush.msra.mxu0 %v483
        %503 = vmatpush.msra.mxu0 %v482
        %504 = vmatpush.msra.mxu0 %v481
        %505 = vmatpush.msra.mxu0 %v480
        %506 = vmatpush.msra.mxu0 %v479
        %507 = vmatpush.msra.mxu0 %v478
        %508 = vmatpush.msra.mxu0 %v477
        %509 = vmatmul.f32.gmra.mxu0 %v476
        %v510 = vpop.f32.mrf.mxu0
        %v511 = vadd.f32 0.0, %v510
        %512 = vdwg.mxu0
        %v513 = vld [vmem:[%s4] sm:$0x1]
        %v515 = vperm.slane %v513, 0
        %v517 = vsub.f32 %v511, %v515
        %v518 = vmul.f32 %v517, 5.0
        %v519 = vtanh.pop %v518
        %v520 = vadd.f32 %v511, %v515
        %v521 = vmul.f32 %v520, 5.0
        %v522 = vtanh.pop %v521
        %v523 = vsub.f32 %v519, %v522
        %v524 = vmul.f32 %v523, 0.5
        %v525 = vadd.f32 %v524, 1.0
        %v526 = vmul.f32 %v511, %v525
        %v527 = vld [vmem:[#allocation7] sm:$0xff]
        %v528 = vld [vmem:[#allocation7 + $0x8] sm:$0xff]
        %v529 = vld [vmem:[#allocation7 + $0x10] sm:$0xff]
        %v530 = vld [vmem:[#allocation7 + $0x18] sm:$0xff]
        %v531 = vld [vmem:[#allocation7 + $0x20] sm:$0xff]
        %v532 = vld [vmem:[#allocation7 + $0x28] sm:$0xff]
        %v533 = vld [vmem:[#allocation7 + $0x30] sm:$0xff]
        %v534 = vld [vmem:[#allocation7 + $0x38] sm:$0xff]
        %v535 = vld [vmem:[#allocation7 + $0x40] sm:$0xff]
        %v536 = vld [vmem:[#allocation7 + $0x48] sm:$0xff]
        %v537 = vld [vmem:[#allocation7 + $0x50] sm:$0xff]
        %v538 = vld [vmem:[#allocation7 + $0x58] sm:$0xff]
        %v539 = vld [vmem:[#allocation7 + $0x60] sm:$0xff]
        %v540 = vld [vmem:[#allocation7 + $0x68] sm:$0xff]
        %v541 = vld [vmem:[#allocation7 + $0x70] sm:$0xff]
        %v542 = vld [vmem:[#allocation7 + $0x78] sm:$0xff]
        %543 = vmatpush.msra.mxu0 %v542
        %544 = vmatpush.msra.mxu0 %v541
        %545 = vmatpush.msra.mxu0 %v540
        %546 = vmatpush.msra.mxu0 %v539
        %547 = vmatpush.msra.mxu0 %v538
        %548 = vmatpush.msra.mxu0 %v537
        %549 = vmatpush.msra.mxu0 %v536
        %550 = vmatpush.msra.mxu0 %v535
        %551 = vmatpush.msra.mxu0 %v534
        %552 = vmatpush.msra.mxu0 %v533
        %553 = vmatpush.msra.mxu0 %v532
        %554 = vmatpush.msra.mxu0 %v531
        %555 = vmatpush.msra.mxu0 %v530
        %556 = vmatpush.msra.mxu0 %v529
        %557 = vmatpush.msra.mxu0 %v528
        %558 = vmatpush.msra.mxu0 %v527
        %559 = vmatmul.f32.gmra.mxu0 %v526
        %v560 = vpop.f32.mrf.mxu0
        %v561 = vadd.f32 0.0, %v560
        %562 = vdwg.mxu0
        %v563 = vld [vmem:[%s5] sm:$0x1]
        %v565 = vperm.slane %v563, 0
        %v567 = vsub.f32 %v561, %v565
        %v568 = vmul.f32 %v567, 5.0
        %v569 = vtanh.pop %v568
        %v570 = vadd.f32 %v561, %v565
        %v571 = vmul.f32 %v570, 5.0
        %v572 = vtanh.pop %v571
        %v573 = vsub.f32 %v569, %v572
        %v574 = vmul.f32 %v573, 0.5
        %v575 = vadd.f32 %v574, 1.0
        %v576 = vmul.f32 %v561, %v575
        %v577 = vld [vmem:[#allocation8] sm:$0xff]
        %v578 = vld [vmem:[#allocation8 + $0x8] sm:$0xff]
        %v579 = vld [vmem:[#allocation8 + $0x10] sm:$0xff]
        %v580 = vld [vmem:[#allocation8 + $0x18] sm:$0xff]
        %v581 = vld [vmem:[#allocation8 + $0x20] sm:$0xff]
        %v582 = vld [vmem:[#allocation8 + $0x28] sm:$0xff]
        %v583 = vld [vmem:[#allocation8 + $0x30] sm:$0xff]
        %v584 = vld [vmem:[#allocation8 + $0x38] sm:$0xff]
        %v585 = vld [vmem:[#allocation8 + $0x40] sm:$0xff]
        %v586 = vld [vmem:[#allocation8 + $0x48] sm:$0xff]
        %v587 = vld [vmem:[#allocation8 + $0x50] sm:$0xff]
        %v588 = vld [vmem:[#allocation8 + $0x58] sm:$0xff]
        %v589 = vld [vmem:[#allocation8 + $0x60] sm:$0xff]
        %v590 = vld [vmem:[#allocation8 + $0x68] sm:$0xff]
        %v591 = vld [vmem:[#allocation8 + $0x70] sm:$0xff]
        %v592 = vld [vmem:[#allocation8 + $0x78] sm:$0xff]
        %593 = vmatpush.msra.mxu0 %v592
        %594 = vmatpush.msra.mxu0 %v591
        %595 = vmatpush.msra.mxu0 %v590
        %596 = vmatpush.msra.mxu0 %v589
        %597 = vmatpush.msra.mxu0 %v588
        %598 = vmatpush.msra.mxu0 %v587
        %599 = vmatpush.msra.mxu0 %v586
        %600 = vmatpush.msra.mxu0 %v585
        %601 = vmatpush.msra.mxu0 %v584
        %602 = vmatpush.msra.mxu0 %v583
        %603 = vmatpush.msra.mxu0 %v582
        %604 = vmatpush.msra.mxu0 %v581
        %605 = vmatpush.msra.mxu0 %v580
        %606 = vmatpush.msra.mxu0 %v579
        %607 = vmatpush.msra.mxu0 %v578
        %608 = vmatpush.msra.mxu0 %v577
        %609 = vmatmul.f32.gmra.mxu0 %v576
        %v610 = vpop.f32.mrf.mxu0
        %v611 = vadd.f32 0.0, %v610
        %612 = vdwg.mxu0
        %v613 = vld [vmem:[%s6] sm:$0x1]
        %v615 = vperm.slane %v613, 0
        %v617 = vsub.f32 %v611, %v615
        %v618 = vmul.f32 %v617, 5.0
        %v619 = vtanh.pop %v618
        %v620 = vadd.f32 %v611, %v615
        %v621 = vmul.f32 %v620, 5.0
        %v622 = vtanh.pop %v621
        %v623 = vsub.f32 %v619, %v622
        %v624 = vmul.f32 %v623, 0.5
        %v625 = vadd.f32 %v624, 1.0
        %v626 = vmul.f32 %v611, %v625
        %v627 = vld [vmem:[#allocation13] sm:$0xff]
        %v628 = vld [vmem:[#allocation13 + $0x8] sm:$0xff]
        %v629 = vld [vmem:[#allocation13 + $0x10] sm:$0xff]
        %v630 = vld [vmem:[#allocation13 + $0x18] sm:$0xff]
        %v631 = vld [vmem:[#allocation13 + $0x20] sm:$0xff]
        %v632 = vld [vmem:[#allocation13 + $0x28] sm:$0xff]
        %v633 = vld [vmem:[#allocation13 + $0x30] sm:$0xff]
        %v634 = vld [vmem:[#allocation13 + $0x38] sm:$0xff]
        %v635 = vld [vmem:[#allocation13 + $0x40] sm:$0xff]
        %v636 = vld [vmem:[#allocation13 + $0x48] sm:$0xff]
        %v637 = vld [vmem:[#allocation13 + $0x50] sm:$0xff]
        %v638 = vld [vmem:[#allocation13 + $0x58] sm:$0xff]
        %v639 = vld [vmem:[#allocation13 + $0x60] sm:$0xff]
        %v640 = vld [vmem:[#allocation13 + $0x68] sm:$0xff]
        %v641 = vld [vmem:[#allocation13 + $0x70] sm:$0xff]
        %v642 = vld [vmem:[#allocation13 + $0x78] sm:$0xff]
        %643 = vmatpush.msra.mxu0 %v642
        %644 = vmatpush.msra.mxu0 %v641
        %645 = vmatpush.msra.mxu0 %v640
        %646 = vmatpush.msra.mxu0 %v639
        %647 = vmatpush.msra.mxu0 %v638
        %648 = vmatpush.msra.mxu0 %v637
        %649 = vmatpush.msra.mxu0 %v636
        %650 = vmatpush.msra.mxu0 %v635
        %651 = vmatpush.msra.mxu0 %v634
        %652 = vmatpush.msra.mxu0 %v633
        %653 = vmatpush.msra.mxu0 %v632
        %654 = vmatpush.msra.mxu0 %v631
        %655 = vmatpush.msra.mxu0 %v630
        %656 = vmatpush.msra.mxu0 %v629
        %657 = vmatpush.msra.mxu0 %v628
        %658 = vmatpush.msra.mxu0 %v627
        %659 = vmatmul.f32.gmra.mxu0 %v626
        %v660 = vpop.f32.mrf.mxu0
        %v661 = vadd.f32 0.0, %v660
        %662 = vdwg.mxu0
        %v663 = vld [vmem:[#allocation11] sm:$0xff]
        %v664 = vld [vmem:[#allocation11 + $0x8] sm:$0xff]
        %v665 = vld [vmem:[#allocation11 + $0x10] sm:$0xff]
        %v666 = vld [vmem:[#allocation11 + $0x18] sm:$0xff]
        %v667 = vld [vmem:[#allocation11 + $0x20] sm:$0xff]
        %v668 = vld [vmem:[#allocation11 + $0x28] sm:$0xff]
        %v669 = vld [vmem:[#allocation11 + $0x30] sm:$0xff]
        %v670 = vld [vmem:[#allocation11 + $0x38] sm:$0xff]
        %v671 = vld [vmem:[#allocation11 + $0x40] sm:$0xff]
        %v672 = vld [vmem:[#allocation11 + $0x48] sm:$0xff]
        %v673 = vld [vmem:[#allocation11 + $0x50] sm:$0xff]
        %v674 = vld [vmem:[#allocation11 + $0x58] sm:$0xff]
        %v675 = vld [vmem:[#allocation11 + $0x60] sm:$0xff]
        %v676 = vld [vmem:[#allocation11 + $0x68] sm:$0xff]
        %v677 = vld [vmem:[#allocation11 + $0x70] sm:$0xff]
        %v678 = vld [vmem:[#allocation11 + $0x78] sm:$0xff]
        %679 = vmatpush.msra.mxu0 %v678
        %680 = vmatpush.msra.mxu0 %v677
        %681 = vmatpush.msra.mxu0 %v676
        %682 = vmatpush.msra.mxu0 %v675
        %683 = vmatpush.msra.mxu0 %v674
        %684 = vmatpush.msra.mxu0 %v673
        %685 = vmatpush.msra.mxu0 %v672
        %686 = vmatpush.msra.mxu0 %v671
        %687 = vmatpush.msra.mxu0 %v670
        %688 = vmatpush.msra.mxu0 %v669
        %689 = vmatpush.msra.mxu0 %v668
        %690 = vmatpush.msra.mxu0 %v667
        %691 = vmatpush.msra.mxu0 %v666
        %692 = vmatpush.msra.mxu0 %v665
        %693 = vmatpush.msra.mxu0 %v664
        %694 = vmatpush.msra.mxu0 %v663
        %695 = vmatmul.f32.gmra.mxu0 %v661
        %v696 = vpop.f32.mrf.mxu0
        %v697 = vadd.f32 0.0, %v696
        %698 = vdwg.mxu0
        %v699 = vld [vmem:[#allocation10] sm:$0xff]
        %v700 = vld [vmem:[#allocation10 + $0x8] sm:$0xff]
        %v701 = vld [vmem:[#allocation10 + $0x10] sm:$0xff]
        %v702 = vld [vmem:[#allocation10 + $0x18] sm:$0xff]
        %v703 = vld [vmem:[#allocation10 + $0x20] sm:$0xff]
        %v704 = vld [vmem:[#allocation10 + $0x28] sm:$0xff]
        %v705 = vld [vmem:[#allocation10 + $0x30] sm:$0xff]
        %v706 = vld [vmem:[#allocation10 + $0x38] sm:$0xff]
        %v707 = vld [vmem:[#allocation10 + $0x40] sm:$0xff]
        %v708 = vld [vmem:[#allocation10 + $0x48] sm:$0xff]
        %v709 = vld [vmem:[#allocation10 + $0x50] sm:$0xff]
        %v710 = vld [vmem:[#allocation10 + $0x58] sm:$0xff]
        %v711 = vld [vmem:[#allocation10 + $0x60] sm:$0xff]
        %v712 = vld [vmem:[#allocation10 + $0x68] sm:$0xff]
        %v713 = vld [vmem:[#allocation10 + $0x70] sm:$0xff]
        %v714 = vld [vmem:[#allocation10 + $0x78] sm:$0xff]
        %715 = vmatpush.msra.mxu0 %v714
        %716 = vmatpush.msra.mxu0 %v713
        %717 = vmatpush.msra.mxu0 %v712
        %718 = vmatpush.msra.mxu0 %v711
        %719 = vmatpush.msra.mxu0 %v710
        %720 = vmatpush.msra.mxu0 %v709
        %721 = vmatpush.msra.mxu0 %v708
        %722 = vmatpush.msra.mxu0 %v707
        %723 = vmatpush.msra.mxu0 %v706
        %724 = vmatpush.msra.mxu0 %v705
        %725 = vmatpush.msra.mxu0 %v704
        %726 = vmatpush.msra.mxu0 %v703
        %727 = vmatpush.msra.mxu0 %v702
        %728 = vmatpush.msra.mxu0 %v701
        %729 = vmatpush.msra.mxu0 %v700
        %730 = vmatpush.msra.mxu0 %v699
        %731 = vmatmul.f32.gmra.mxu0 %v697
        %v732 = vpop.f32.mrf.mxu0
        %v733 = vadd.f32 0.0, %v732
        %734 = vdwg.mxu0
        %735 = vst [vmem:[%s475] sm:$0xff] %v733
        %s736 = sand.u32 %s253, 1
        %s737 = scalar_lea.sflag [#allocation4], %s736
        %s738 = sand.u32 %s253, 1
        %s739 = smul.addr %s738, 8
        %s740 = scalar_lea.vmem [#allocation14], %s739
        // Predicated region
        $region89: #{tpu_custom_call.1} parent=59 // pred_check
          %p741 = pneg %p263
        $region90: #{tpu_custom_call.1} parent=59 // pred_check_branch
          %743 = sbr.rel (%p741) target = $region92
        $region91: #{tpu_custom_call.1} parent=59 // pred_region
          %745 = vsyncadd %s737, 0
          %s746 = smul.addr %s30, 8
          %s747 = scalar_lea.hbm %s10, %s746
          %s749 = sshll.u32 %s740, 4
          %s750 = int_to_ptr.vmem [resolvable:$true] %s749
          %s751 = sshll.u32 %s747, 4
          %s752 = int_to_ptr.hbm [resolvable:$true] %s751
          %754 = dma.vmem_to_hbm [thread:$0]  %s750, 128, %s752, %s737
        $region92: #{tpu_custom_call.1} parent=59 // pred_fallthru
          _
      $region60: #{tpu_custom_call.1} parent=5 // pred_fallthru
        _
      %p755 = scmp.le.s32.totalorder 2, %s25
      // Predicated region
      $region93: #{tpu_custom_call.1} parent=5 // pred_check
        %p756 = pneg %p755
      $region94: #{tpu_custom_call.1} parent=5 // pred_check_branch
        %758 = sbr.rel (%p756) target = $region96
      $region95: #{tpu_custom_call.1} parent=5 // pred_region
        %s759 = ssub.s32 %s25, 2
        // Predicated region
        $region97: #{tpu_custom_call.1} parent=95 // pred_check
          %p760 = pneg %p269
        $region98: #{tpu_custom_call.1} parent=95 // pred_check_branch
          %762 = sbr.rel (%p760) target = $region100
        $region99: #{tpu_custom_call.1} parent=95 // pred_region
          %s763 = sand.u32 %s254, 1
          %s764 = scalar_lea.sflag [#allocation4], %s763
          %s765 = sand.u32 %s254, 1
          %s766 = smul.addr %s765, 8
          %s767 = scalar_lea.vmem [#allocation14], %s766
          %769 = dma.done %s764, 128
        $region100: #{tpu_custom_call.1} parent=95 // pred_fallthru
          _
      $region96: #{tpu_custom_call.1} parent=5 // pred_fallthru
        _
    $region6: #{tpu_custom_call.1} parent=1 // loop_footer
      %s29 = sadd.s32 1, %s25
    $region7: #{tpu_custom_call.1} parent=1 // loop_footer_branch
      %24 = sbr.rel target = $region3
    $region8: #{tpu_custom_call.1} parent=1 // loop_exit
      _
    %770 = vsyncpa [#allocation3], 1
    %s771 = scalar_lea.sflag [#allocation3], 1
    %772 = vsyncpa %s771, 1
    %773 = vsyncpa [#allocation6], 1
    %774 = vsyncpa [#allocation9], 1
    %775 = vsyncpa [#allocation12], 1
    %776 = vsyncpa [#allocation4], 1
    %s777 = scalar_lea.sflag [#allocation4], 1
    %778 = vsyncpa %s777, 1

</llo_original>
